<compile_context>
chip_gen: v6e
topology: v6e:2x2x1
jax: 0.10.0
libtpu: 0.0.40
codegen_flags: <defaults>
</compile_context>

<pallas_src>
import functools

import jax
import jax.numpy as jnp
from jax.experimental import pallas as pl
from jax.experimental.pallas import tpu as pltpu

BN_EPS = 1e-5        # nn.BatchNorm1d default
NORM_EPS = 1e-12     # F.normalize default


def _round_up(x, m):
    return (x + m - 1) // m * m


def _pad2(x, shape):
    return jnp.pad(x, ((0, shape[0] - x.shape[0]), (0, shape[1] - x.shape[1])))


def _vmem_cap_bytes():
    """~85% of this generation's physical VMEM (64 MiB-safe fallback)."""
    try:
        cap = int(pltpu.get_tpu_info().vmem_capacity_bytes)
    except Exception:
        cap = 64 << 20   # v7x-sized fallback; safe on every generation
    return int(cap * 0.85)


def byol_head_kernel(latent_ref, target_ref, w1_ref, gamma_ref, beta_ref,
                     w2_ref, out_ref, *scratch, n_total, cache_h):
    if cache_h:
        h_cache_ref, stat_sum_ref, stat_sq_ref, loss_acc_ref = scratch
    else:
        stat_sum_ref, stat_sq_ref, loss_acc_ref = scratch
        h_cache_ref = None

    phase = pl.program_id(0)          # 0: BN statistics pass, 1: loss pass
    rt = pl.program_id(1)             # row-tile index
    last_rt = pl.num_programs(1) - 1

    @pl.when(phase == 0)
    def _bn_stats():
        @pl.when(rt == 0)
        def _init():
            stat_sum_ref[...] = jnp.zeros_like(stat_sum_ref)
            stat_sq_ref[...] = jnp.zeros_like(stat_sq_ref)
            loss_acc_ref[0, 0] = jnp.float32(0.0)

        # NOTE: the Linear bias b1 is intentionally absent -- it is exactly
        # cancelled by the training-mode BatchNorm mean subtraction.
        h = jnp.dot(latent_ref[...], w1_ref[...],
                    preferred_element_type=jnp.float32)        # (tile_n, Hp) f32
        stat_sum_ref[...] += jnp.sum(h, axis=0, keepdims=True)
        stat_sq_ref[...] += jnp.sum(h * h, axis=0, keepdims=True)
        if cache_h:
            h_cache_ref[rt] = h.astype(h_cache_ref.dtype)

    @pl.when(phase == 1)
    def _normalize_and_loss():
        if cache_h:
            h = h_cache_ref[rt].astype(jnp.float32)             # (tile_n, Hp)
        else:
            # TODO(synk): spill h to an HBM scratch (pl.ANY ref + async copy)
            # instead of recomputing when the VMEM cache does not fit.
            h = jnp.dot(latent_ref[...], w1_ref[...],
                        preferred_element_type=jnp.float32)

        inv_n = 1.0 / float(n_total)
        # Single-pass batch statistics (biased variance, PyTorch training mode).
        # TODO(synk): shifted sums / Welford merge if tighter parity with the
        # two-pass reference is required at very large N.
        mean = stat_sum_ref[...] * inv_n                                 # (1, Hp)
        var = jnp.maximum(stat_sq_ref[...] * inv_n - mean * mean, 0.0)   # (1, Hp)
        inv_std = jax.lax.rsqrt(var + BN_EPS)
        scale = gamma_ref[...] * inv_std                                 # (1, Hp)
        shift = beta_ref[...] - mean * scale                             # (1, Hp)

        # BN affine + ReLU in one pass over the activations.
        a = jnp.maximum(h * scale + shift, 0.0)                          # (tile_n, Hp)

        pred = jnp.dot(a.astype(w2_ref.dtype), w2_ref[...],
                       preferred_element_type=jnp.float32)               # (tile_n, Dp)

        t = target_ref[...].astype(jnp.float32)                          # (tile_n, Dp)
        # F.normalize: x / max(||x||, eps)  ==  x * rsqrt(max(||x||^2, eps^2))
        p_inv = jax.lax.rsqrt(jnp.maximum(
            jnp.sum(pred * pred, axis=1, keepdims=True), NORM_EPS * NORM_EPS))
        t_inv = jax.lax.rsqrt(jnp.maximum(
            jnp.sum(t * t, axis=1, keepdims=True), NORM_EPS * NORM_EPS))
        cos = jnp.sum(pred * t, axis=1, keepdims=True) * p_inv * t_inv   # (tile_n, 1)

        # Scalar loss accumulation in SMEM (no padded (8,128) VMEM RMW per tile).
        loss_acc_ref[0, 0] += (-inv_n) * jnp.sum(cos)

        @pl.when(rt == last_rt)
        def _finalize():
            out_ref[0, 0] = loss_acc_ref[0, 0]


def byol_head_forward(latent, target, w1, b1, gamma, beta, w2, *,
                      use_bf16_matmul=True, max_row_tile=512):
    """Returns dict(loss=scalar) matching BYOLHead.forward (training mode)."""
    n, input_dim = latent.shape
    hidden_dim = w1.shape[1]
    output_dim = w2.shape[1]
    assert target.shape == (n, output_dim)
    assert b1.shape == (1, hidden_dim)
    del b1  # exactly cancelled by training-mode BatchNorm mean subtraction

    # Lane-dense (multiple-of-128) feature dims; padded columns are zero
    # (gamma/beta padded with 0), so they contribute nothing to the loss.
    din_p = _round_up(input_dim, 128)
    h_p = _round_up(hidden_dim, 128)
    dout_p = _round_up(output_dim, 128)

    mm_dtype = jnp.bfloat16 if use_bf16_matmul else jnp.float32
    tgt_dtype = jnp.bfloat16 if use_bf16_matmul else jnp.float32
    cache_dtype = jnp.bfloat16 if use_bf16_matmul else jnp.float32

    # Row tiling: pad N with zero rows up to a multiple of the row tile.
    row_align = 16 if use_bf16_matmul else 8   # bf16 packs 2 rows per sublane
    cap = _vmem_cap_bytes()

    act_isz = jnp.dtype(mm_dtype).itemsize
    tgt_isz = jnp.dtype(tgt_dtype).itemsize
    cache_isz = jnp.dtype(cache_dtype).itemsize

    def vmem_need(tile_rows, n_rows_pad, cached):
        b = 0
        # BlockSpec'd inputs: count the implicit pipeline double-buffering
        # (2x), including the constant-index resident weight/param specs.
        b += 2 * tile_rows * din_p * act_isz              # latent tiles
        b += 2 * tile_rows * dout_p * tgt_isz             # target tiles
        b += 2 * din_p * h_p * act_isz                    # W1
        b += 2 * h_p * dout_p * act_isz                   # W2
        b += 2 * 2 * h_p * 4                              # gamma, beta
        b += 2 * h_p * 4 + 128                            # BN stat scratch (+SMEM loss)
        if cached:
            b += n_rows_pad * h_p * cache_isz             # cached activations
        # live f32 intermediates (h, a, pred, t, per-row reductions)
        b += 2 * tile_rows * h_p * 4 + 3 * tile_rows * dout_p * 4
        return b

    tile_init = max(row_align,
                    min(_round_up(max_row_tile, row_align),
                        _round_up(n, row_align)))

    # Prefer caching h in VMEM (phase 1 then skips the latent@W1 recompute and
    # the second latent HBM read); shrink the row tile before giving it up.
    tile_n, cache_h = tile_init, True
    while vmem_need(tile_n, _round_up(n, tile_n), True) > cap:
        if tile_n > row_align:
            tile_n = max(row_align, _round_up(tile_n // 2, row_align))
            continue
        # TODO(synk): spill h to an HBM scratch instead of recomputing.
        cache_h = False
        tile_n = tile_init
        while (vmem_need(tile_n, _round_up(n, tile_n), False) > cap
               and tile_n > row_align):
            tile_n = max(row_align, _round_up(tile_n // 2, row_align))
        break

    n_pad = _round_up(n, tile_n)
    nrt = n_pad // tile_n
    need = vmem_need(tile_n, n_pad, cache_h)
    vmem_limit = min(cap, max(int(need * 3 // 2), 32 << 20))

    latent_p = _pad2(latent, (n_pad, din_p)).astype(mm_dtype)
    target_p = _pad2(target, (n_pad, dout_p)).astype(tgt_dtype)
    w1_p = _pad2(w1, (din_p, h_p)).astype(mm_dtype)
    w2_p = _pad2(w2, (h_p, dout_p)).astype(mm_dtype)
    gamma_p = _pad2(gamma, (1, h_p)).astype(jnp.float32)
    beta_p = _pad2(beta, (1, h_p)).astype(jnp.float32)

    grid = (2, nrt)   # (phase, row tile); row tiles iterate fastest

    if cache_h:
        # Phase 1 never touches latent: pin its block index during phase 1 so
        # there is no per-tile latent re-DMA in the loss pass.
        latent_map = lambda p, r: ((1 - p) * r, 0)
    else:
        latent_map = lambda p, r: (r, 0)
    # target only used in phase 1: block 0 during phase 0 (fetched once).
    target_map = lambda p, r: (p * r, 0)
    const_map = lambda p, r: (0, 0)

    scratch_shapes = []
    if cache_h:
        scratch_shapes.append(pltpu.VMEM((nrt, tile_n, h_p), cache_dtype))
    scratch_shapes += [
        pltpu.VMEM((1, h_p), jnp.float32),   # per-feature sum
        pltpu.VMEM((1, h_p), jnp.float32),   # per-feature sum of squares
        pltpu.SMEM((1, 1), jnp.float32),     # scalar loss accumulator
    ]

    kernel = functools.partial(byol_head_kernel, n_total=n, cache_h=cache_h)

    loss = pl.pallas_call(
        kernel,
        out_shape=jax.ShapeDtypeStruct((1, 1), jnp.float32),
        grid=grid,
        in_specs=[
            pl.BlockSpec((tile_n, din_p), latent_map),
            pl.BlockSpec((tile_n, dout_p), target_map),
            # Weights / BN params stay VMEM-resident across the whole grid.
            # (Their implicit second pipeline buffer is counted in vmem_need;
            # pipeline_mode=pl.Buffered(1) could drop it.)
            pl.BlockSpec((din_p, h_p), const_map),
            pl.BlockSpec((1, h_p), const_map),
            pl.BlockSpec((1, h_p), const_map),
            pl.BlockSpec((h_p, dout_p), const_map),
        ],
        # Scalar loss lives in SMEM (no padded (8,128) VMEM tile / masked vst).
        out_specs=pl.BlockSpec(memory_space=pltpu.SMEM),
        scratch_shapes=scratch_shapes,
        compiler_params=pltpu.CompilerParams(
            # Both axes carry accumulator dependencies (BN stats / loss).
            dimension_semantics=("arbitrary", "arbitrary"),
            vmem_limit_bytes=vmem_limit,
        ),
    )(latent_p, target_p, w1_p, gamma_p, beta_p, w2_p)

    return dict(loss=loss[0, 0])


if __name__ == "__main__":
    # Small config consistent with the module: cfg.input_dim / hidden_dim / output_dim
    N, INPUT_DIM, HIDDEN_DIM, OUTPUT_DIM = 8, 32, 64, 32

    key = jax.random.PRNGKey(0)
    k_lat, k_tgt, k_w1, k_b1, k_w2 = jax.random.split(key, 5)

    latent = jax.random.normal(k_lat, (N, INPUT_DIM), dtype=jnp.float32)
    target = jax.random.normal(k_tgt, (N, OUTPUT_DIM), dtype=jnp.float32)

    # PyTorch Linear weight is (out, in); we store the transpose so the kernel
    # does x @ W directly.
    w1 = jax.random.normal(k_w1, (INPUT_DIM, HIDDEN_DIM), dtype=jnp.float32) * 0.05
    b1 = jax.random.normal(k_b1, (1, HIDDEN_DIM), dtype=jnp.float32) * 0.01
    gamma = jnp.ones((1, HIDDEN_DIM), dtype=jnp.float32)   # BatchNorm1d affine init
    beta = jnp.zeros((1, HIDDEN_DIM), dtype=jnp.float32)
    w2 = jax.random.normal(k_w2, (HIDDEN_DIM, OUTPUT_DIM), dtype=jnp.float32) * 0.05

    # Pure-JAX f32 reference of the PyTorch training-mode forward.
    h = latent @ w1 + b1
    mu = h.mean(0, keepdims=True)
    var = ((h - mu) ** 2).mean(0, keepdims=True)
    hn = (h - mu) / jnp.sqrt(var + BN_EPS) * gamma + beta
    hn = jnp.maximum(hn, 0.0)
    pred = hn @ w2
    pn = pred / jnp.maximum(jnp.linalg.norm(pred, axis=1, keepdims=True), NORM_EPS)
    tn = target / jnp.maximum(jnp.linalg.norm(target, axis=1, keepdims=True), NORM_EPS)
    ref_loss = -(pn * tn).sum(1).mean()

    # f32 MXU path: tight check.
    out_f32 = byol_head_forward(latent, target, w1, b1, gamma, beta, w2,
                                use_bf16_matmul=False)
    loss_f32 = jax.block_until_ready(out_f32["loss"])
    assert jnp.allclose(loss_f32, ref_loss, atol=1e-4, rtol=1e-4), (loss_f32, ref_loss)

    # bf16 MXU path (the default): loose check vs f32 reference.
    out_bf16 = byol_head_forward(latent, target, w1, b1, gamma, beta, w2)
    loss_bf16 = jax.block_until_ready(out_bf16["loss"])
    assert jnp.allclose(loss_bf16, ref_loss, atol=3e-2), (loss_bf16, ref_loss)

    print("KERNEL_OK")
</pallas_src>

<mosaic_0001>
module attributes {stable_mosaic.version = 11 : i64} {
  func.func @byol_head_kernel(%arg0: i32, %arg1: i32, %arg2: memref<8x128xf32, #tpu.memory_space<vmem>>, %arg3: memref<8x128xf32, #tpu.memory_space<vmem>>, %arg4: memref<128x128xf32, #tpu.memory_space<vmem>>, %arg5: memref<1x128xf32, #tpu.memory_space<vmem>>, %arg6: memref<1x128xf32, #tpu.memory_space<vmem>>, %arg7: memref<128x128xf32, #tpu.memory_space<vmem>>, %arg8: memref<1x1xf32, #tpu.memory_space<smem>>, %arg9: memref<1x8x128xf32, #tpu.memory_space<vmem>>, %arg10: memref<1x128xf32, #tpu.memory_space<vmem>>, %arg11: memref<1x128xf32, #tpu.memory_space<vmem>>, %arg12: memref<1x1xf32, #tpu.memory_space<smem>>) attributes {dimension_semantics = [#tpu.dimension_semantics<arbitrary>, #tpu.dimension_semantics<arbitrary>], iteration_bounds = array<i64: 2, 1>, scalar_prefetch = 0 : i64, scratch_operands = 4 : i64, tpu.core_type = #tpu.core_type<tc>, window_params = [{transform_indices = @transform_0, window_bounds = array<i64: 8, 128>}, {transform_indices = @transform_1, window_bounds = array<i64: 8, 128>}, {pipeline_mode = #tpu.pipeline_mode<synchronous>, transform_indices = @transform_2, window_bounds = array<i64: 128, 128>}, {pipeline_mode = #tpu.pipeline_mode<synchronous>, transform_indices = @transform_3, window_bounds = array<i64: 1, 128>}, {pipeline_mode = #tpu.pipeline_mode<synchronous>, transform_indices = @transform_4, window_bounds = array<i64: 1, 128>}, {pipeline_mode = #tpu.pipeline_mode<synchronous>, transform_indices = @transform_5, window_bounds = array<i64: 128, 128>}, {transform_indices = @transform_6, window_bounds = array<i64: 1, 1>}]} {
    %c0_i32 = arith.constant 0 : i32
    %0 = arith.cmpi eq, %arg0, %c0_i32 : i32
    %1 = arith.extui %0 : i1 to i32
    %c0_i32_0 = arith.constant 0 : i32
    %2 = arith.cmpi ne, %1, %c0_i32_0 : i32
    scf.if %2 {
      %c0_i32_2 = arith.constant 0 : i32
      %6 = arith.cmpi eq, %arg1, %c0_i32_2 : i32
      %7 = arith.extui %6 : i1 to i32
      %c0_i32_3 = arith.constant 0 : i32
      %8 = arith.cmpi ne, %7, %c0_i32_3 : i32
      scf.if %8 {
        %cst_19 = arith.constant 0.000000e+00 : f32
        %27 = vector.broadcast %cst_19 : f32 to vector<1x128xf32>
        %c0_20 = arith.constant 0 : index
        %c0_21 = arith.constant 0 : index
        %28 = vector.load %arg10[%c0_20, %c0_21] : memref<1x128xf32, #tpu.memory_space<vmem>>, vector<1x128xf32>
        tpu.vector_store %arg10[%c0_20, %c0_21], %27 {strides = array<i32>} : memref<1x128xf32, #tpu.memory_space<vmem>>, vector<1x128xf32>,
        %cst_22 = arith.constant 0.000000e+00 : f32
        %29 = vector.broadcast %cst_22 : f32 to vector<1x128xf32>
        %c0_23 = arith.constant 0 : index
        %c0_24 = arith.constant 0 : index
        %30 = vector.load %arg11[%c0_23, %c0_24] : memref<1x128xf32, #tpu.memory_space<vmem>>, vector<1x128xf32>
        tpu.vector_store %arg11[%c0_23, %c0_24], %29 {strides = array<i32>} : memref<1x128xf32, #tpu.memory_space<vmem>>, vector<1x128xf32>,
        %cst_25 = arith.constant 0.000000e+00 : f32
        %c0_26 = arith.constant 0 : index
        %c0_27 = arith.constant 0 : index
        %31 = memref.load %arg12[%c0_26, %c0_27] : memref<1x1xf32, #tpu.memory_space<smem>>
        memref.store %cst_25, %arg12[%c0_26, %c0_27] : memref<1x1xf32, #tpu.memory_space<smem>>
      } else {
      }
      %c0 = arith.constant 0 : index
      %c0_4 = arith.constant 0 : index
      %9 = vector.load %arg2[%c0, %c0_4] : memref<8x128xf32, #tpu.memory_space<vmem>>, vector<8x128xf32>
      %c0_5 = arith.constant 0 : index
      %c0_6 = arith.constant 0 : index
      %10 = vector.load %arg4[%c0_5, %c0_6] : memref<128x128xf32, #tpu.memory_space<vmem>>, vector<128x128xf32>
      %cst = arith.constant dense<0.000000e+00> : vector<8x128xf32>
      %11 = tpu.matmul %9, %10, %cst {dimension_numbers = #tpu.dot_dimension_numbers<[1], [0], [0], [1], [0, 0, 1, 1], [], []>} : vector<8x128xf32>, vector<128x128xf32>, vector<8x128xf32> -> vector<8x128xf32>
      %c0_7 = arith.constant 0 : index
      %c0_8 = arith.constant 0 : index
      %12 = vector.load %arg10[%c0_7, %c0_8] : memref<1x128xf32, #tpu.memory_space<vmem>>, vector<1x128xf32>
      %cst_9 = arith.constant dense<0.000000e+00> : vector<128xf32>
      %13 = vector.multi_reduction <add>, %11, %cst_9 [0] : vector<8x128xf32> to vector<128xf32>
      %14 = vector.shape_cast %13 : vector<128xf32> to vector<1x128xf32>
      %15 = arith.addf %12, %14 : vector<1x128xf32>
      %c0_10 = arith.constant 0 : index
      %c0_11 = arith.constant 0 : index
      %16 = vector.load %arg10[%c0_10, %c0_11] : memref<1x128xf32, #tpu.memory_space<vmem>>, vector<1x128xf32>
      tpu.vector_store %arg10[%c0_10, %c0_11], %15 {strides = array<i32>} : memref<1x128xf32, #tpu.memory_space<vmem>>, vector<1x128xf32>,
      %c0_12 = arith.constant 0 : index
      %c0_13 = arith.constant 0 : index
      %17 = vector.load %arg11[%c0_12, %c0_13] : memref<1x128xf32, #tpu.memory_space<vmem>>, vector<1x128xf32>
      %18 = arith.mulf %11, %11 : vector<8x128xf32>
      %cst_14 = arith.constant dense<0.000000e+00> : vector<128xf32>
      %19 = vector.multi_reduction <add>, %18, %cst_14 [0] : vector<8x128xf32> to vector<128xf32>
      %20 = vector.shape_cast %19 : vector<128xf32> to vector<1x128xf32>
      %21 = arith.addf %17, %20 : vector<1x128xf32>
      %c0_15 = arith.constant 0 : index
      %c0_16 = arith.constant 0 : index
      %22 = vector.load %arg11[%c0_15, %c0_16] : memref<1x128xf32, #tpu.memory_space<vmem>>, vector<1x128xf32>
      tpu.vector_store %arg11[%c0_15, %c0_16], %21 {strides = array<i32>} : memref<1x128xf32, #tpu.memory_space<vmem>>, vector<1x128xf32>,
      %23 = arith.index_cast %arg1 : i32 to index
      %c0_17 = arith.constant 0 : index
      %c0_18 = arith.constant 0 : index
      %24 = vector.load %arg9[%23, %c0_17, %c0_18] : memref<1x8x128xf32, #tpu.memory_space<vmem>>, vector<1x8x128xf32>
      %25 = vector.shape_cast %24 : vector<1x8x128xf32> to vector<8x128xf32>
      %26 = vector.shape_cast %11 : vector<8x128xf32> to vector<1x8x128xf32>
      tpu.vector_store %arg9[%23, %c0_17, %c0_18], %26 {strides = array<i32>} : memref<1x8x128xf32, #tpu.memory_space<vmem>>, vector<1x8x128xf32>,
    } else {
    }
    %c1_i32 = arith.constant 1 : i32
    %3 = arith.cmpi eq, %arg0, %c1_i32 : i32
    %4 = arith.extui %3 : i1 to i32
    %c0_i32_1 = arith.constant 0 : i32
    %5 = arith.cmpi ne, %4, %c0_i32_1 : i32
    scf.if %5 {
      %6 = arith.index_cast %arg1 : i32 to index
      %c0 = arith.constant 0 : index
      %c0_2 = arith.constant 0 : index
      %7 = vector.load %arg9[%6, %c0, %c0_2] : memref<1x8x128xf32, #tpu.memory_space<vmem>>, vector<1x8x128xf32>
      %8 = vector.shape_cast %7 : vector<1x8x128xf32> to vector<8x128xf32>
      %c0_3 = arith.constant 0 : index
      %c0_4 = arith.constant 0 : index
      %9 = vector.load %arg10[%c0_3, %c0_4] : memref<1x128xf32, #tpu.memory_space<vmem>>, vector<1x128xf32>
      %cst = arith.constant 1.250000e-01 : f32
      %10 = vector.broadcast %cst : f32 to vector<1x128xf32>
      %11 = arith.mulf %9, %10 : vector<1x128xf32>
      %c0_5 = arith.constant 0 : index
      %c0_6 = arith.constant 0 : index
      %12 = vector.load %arg11[%c0_5, %c0_6] : memref<1x128xf32, #tpu.memory_space<vmem>>, vector<1x128xf32>
      %cst_7 = arith.constant 1.250000e-01 : f32
      %13 = vector.broadcast %cst_7 : f32 to vector<1x128xf32>
      %14 = arith.mulf %12, %13 : vector<1x128xf32>
      %15 = arith.mulf %11, %11 : vector<1x128xf32>
      %16 = arith.subf %14, %15 : vector<1x128xf32>
      %cst_8 = arith.constant 0.000000e+00 : f32
      %17 = vector.broadcast %cst_8 : f32 to vector<1x128xf32>
      %18 = arith.maximumf %16, %17 : vector<1x128xf32>
      %cst_9 = arith.constant 9.99999974E-6 : f32
      %19 = vector.broadcast %cst_9 : f32 to vector<1x128xf32>
      %20 = arith.addf %18, %19 : vector<1x128xf32>
      %21 = math.rsqrt %20 : vector<1x128xf32>
      %c0_10 = arith.constant 0 : index
      %c0_11 = arith.constant 0 : index
      %22 = vector.load %arg5[%c0_10, %c0_11] : memref<1x128xf32, #tpu.memory_space<vmem>>, vector<1x128xf32>
      %23 = arith.mulf %22, %21 : vector<1x128xf32>
      %c0_12 = arith.constant 0 : index
      %c0_13 = arith.constant 0 : index
      %24 = vector.load %arg6[%c0_12, %c0_13] : memref<1x128xf32, #tpu.memory_space<vmem>>, vector<1x128xf32>
      %25 = arith.mulf %11, %23 : vector<1x128xf32>
      %26 = arith.subf %24, %25 : vector<1x128xf32>
      %27 = vector.broadcast %23 : vector<1x128xf32> to vector<8x128xf32>
      %28 = arith.mulf %8, %27 : vector<8x128xf32>
      %29 = vector.broadcast %26 : vector<1x128xf32> to vector<8x128xf32>
      %30 = arith.addf %28, %29 : vector<8x128xf32>
      %cst_14 = arith.constant 0.000000e+00 : f32
      %31 = vector.broadcast %cst_14 : f32 to vector<8x128xf32>
      %32 = arith.maximumf %30, %31 : vector<8x128xf32>
      %c0_15 = arith.constant 0 : index
      %c0_16 = arith.constant 0 : index
      %33 = vector.load %arg7[%c0_15, %c0_16] : memref<128x128xf32, #tpu.memory_space<vmem>>, vector<128x128xf32>
      %cst_17 = arith.constant dense<0.000000e+00> : vector<8x128xf32>
      %34 = tpu.matmul %32, %33, %cst_17 {dimension_numbers = #tpu.dot_dimension_numbers<[1], [0], [0], [1], [0, 0, 1, 1], [], []>} : vector<8x128xf32>, vector<128x128xf32>, vector<8x128xf32> -> vector<8x128xf32>
      %c0_18 = arith.constant 0 : index
      %c0_19 = arith.constant 0 : index
      %35 = vector.load %arg3[%c0_18, %c0_19] : memref<8x128xf32, #tpu.memory_space<vmem>>, vector<8x128xf32>
      %36 = arith.mulf %34, %34 : vector<8x128xf32>
      %cst_20 = arith.constant dense<0.000000e+00> : vector<8xf32>
      %37 = vector.multi_reduction <add>, %36, %cst_20 [1] : vector<8x128xf32> to vector<8xf32>
      %38 = vector.shape_cast %37 : vector<8xf32> to vector<8x1xf32>
      %cst_21 = arith.constant 1.000000e-24 : f32
      %39 = vector.broadcast %cst_21 : f32 to vector<8x1xf32>
      %40 = arith.maximumf %38, %39 : vector<8x1xf32>
      %41 = math.rsqrt %40 : vector<8x1xf32>
      %42 = arith.mulf %35, %35 : vector<8x128xf32>
      %cst_22 = arith.constant dense<0.000000e+00> : vector<8xf32>
      %43 = vector.multi_reduction <add>, %42, %cst_22 [1] : vector<8x128xf32> to vector<8xf32>
      %44 = vector.shape_cast %43 : vector<8xf32> to vector<8x1xf32>
      %cst_23 = arith.constant 1.000000e-24 : f32
      %45 = vector.broadcast %cst_23 : f32 to vector<8x1xf32>
      %46 = arith.maximumf %44, %45 : vector<8x1xf32>
      %47 = math.rsqrt %46 : vector<8x1xf32>
      %48 = arith.mulf %34, %35 : vector<8x128xf32>
      %cst_24 = arith.constant dense<0.000000e+00> : vector<8xf32>
      %49 = vector.multi_reduction <add>, %48, %cst_24 [1] : vector<8x128xf32> to vector<8xf32>
      %50 = vector.shape_cast %49 : vector<8xf32> to vector<8x1xf32>
      %51 = arith.mulf %50, %41 : vector<8x1xf32>
      %52 = arith.mulf %51, %47 : vector<8x1xf32>
      %c0_25 = arith.constant 0 : index
      %c0_26 = arith.constant 0 : index
      %53 = memref.load %arg12[%c0_25, %c0_26] : memref<1x1xf32, #tpu.memory_space<smem>>
      %54 = vector.shape_cast %52 : vector<8x1xf32> to vector<1x8x1xf32>
      %cst_27 = arith.constant dense<0.000000e+00> : vector<1xf32>
      %55 = vector.multi_reduction <add>, %54, %cst_27 [1, 2] : vector<1x8x1xf32> to vector<1xf32>
      %56 = vector.shape_cast %55 : vector<1xf32> to vector<1x1x1xf32>
      %57 = vector.extract %56[0, 0, 0] : f32 from vector<1x1x1xf32>
      %cst_28 = arith.constant -1.250000e-01 : f32
      %58 = arith.mulf %cst_28, %57 : f32
      %59 = arith.addf %53, %58 : f32
      %c0_29 = arith.constant 0 : index
      %c0_30 = arith.constant 0 : index
      %60 = memref.load %arg12[%c0_29, %c0_30] : memref<1x1xf32, #tpu.memory_space<smem>>
      memref.store %59, %arg12[%c0_29, %c0_30] : memref<1x1xf32, #tpu.memory_space<smem>>
      %c0_i32_31 = arith.constant 0 : i32
      %61 = arith.cmpi eq, %arg1, %c0_i32_31 : i32
      %62 = arith.extui %61 : i1 to i32
      %c0_i32_32 = arith.constant 0 : i32
      %63 = arith.cmpi ne, %62, %c0_i32_32 : i32
      scf.if %63 {
        %c0_33 = arith.constant 0 : index
        %c0_34 = arith.constant 0 : index
        %64 = memref.load %arg12[%c0_33, %c0_34] : memref<1x1xf32, #tpu.memory_space<smem>>
        %c0_35 = arith.constant 0 : index
        %c0_36 = arith.constant 0 : index
        %65 = memref.load %arg8[%c0_35, %c0_36] : memref<1x1xf32, #tpu.memory_space<smem>>
        memref.store %64, %arg8[%c0_35, %c0_36] : memref<1x1xf32, #tpu.memory_space<smem>>
      } else {
      }
    } else {
    }
    return
  }
  func.func @transform_0(%arg0: i32, %arg1: i32) -> (i32, i32) {
    %c1_i32 = arith.constant 1 : i32
    %0 = arith.subi %c1_i32, %arg0 : i32
    %1 = arith.muli %0, %arg1 : i32
    %c0_i32 = arith.constant 0 : i32
    %c0_i32_0 = arith.constant 0 : i32
    return %1, %c0_i32 : i32, i32
  }
  func.func @transform_1(%arg0: i32, %arg1: i32) -> (i32, i32) {
    %0 = arith.muli %arg0, %arg1 : i32
    %c0_i32 = arith.constant 0 : i32
    %c0_i32_0 = arith.constant 0 : i32
    return %0, %c0_i32 : i32, i32
  }
  func.func @transform_2(%arg0: i32, %arg1: i32) -> (i32, i32) {
    %c0_i32 = arith.constant 0 : i32
    %c0_i32_0 = arith.constant 0 : i32
    %c0_i32_1 = arith.constant 0 : i32
    return %c0_i32, %c0_i32_0 : i32, i32
  }
  func.func @transform_3(%arg0: i32, %arg1: i32) -> (i32, i32) {
    %c0_i32 = arith.constant 0 : i32
    %c0_i32_0 = arith.constant 0 : i32
    %c0_i32_1 = arith.constant 0 : i32
    return %c0_i32, %c0_i32_0 : i32, i32
  }
  func.func @transform_4(%arg0: i32, %arg1: i32) -> (i32, i32) {
    %c0_i32 = arith.constant 0 : i32
    %c0_i32_0 = arith.constant 0 : i32
    %c0_i32_1 = arith.constant 0 : i32
    return %c0_i32, %c0_i32_0 : i32, i32
  }
  func.func @transform_5(%arg0: i32, %arg1: i32) -> (i32, i32) {
    %c0_i32 = arith.constant 0 : i32
    %c0_i32_0 = arith.constant 0 : i32
    %c0_i32_1 = arith.constant 0 : i32
    return %c0_i32, %c0_i32_0 : i32, i32
  }
  func.func @transform_6(%arg0: i32, %arg1: i32) -> (i32, i32) {
    %c0_i32 = arith.constant 0 : i32
    %c0_i32_0 = arith.constant 0 : i32
    %c0_i32_1 = arith.constant 0 : i32
    return %c0_i32, %c0_i32_0 : i32, i32
  }
}

</mosaic_0001>

<llo_original>
// kernel: tpu_custom_call.1
$region0: #{tpu_custom_call.1}
  #allocation0 [shape = 'u32[]', space=smem, size = 0x4, offset = 0x4, fixed_abs, tag = 'smem constant byte address 0x4 - core index']
  #allocation1 [shape = 'u32[144,128]{1,0:T(1,128)}', space=vmem, size = 0x12000, scoped, tag = 'internal scratch']
  #allocation2 [shape = 'f32[1,8,128]{2,1,0:T(8,128)}', space=vmem, size = 0x1000, scoped, tag = 'scratch operand']
  #allocation3 [shape = 'f32[1,128]{1,0:T(1,128)}', space=vmem, size = 0x200, scoped, tag = 'scratch operand']
  #allocation4 [shape = 'f32[1,128]{1,0:T(1,128)}', space=vmem, size = 0x200, scoped, tag = 'scratch operand']
  #allocation5 [shape = 'f32[1,1]{1,0:T(1,128)}', space=smem, size = 0x200, scoped, tag = 'scratch operand']
  %s0 = inlined_call_operand.hbm [shape: f32[8,128], index: 0, kind: input, shape index: {}]
  %s1 = inlined_call_operand.hbm [shape: f32[8,128], index: 1, kind: input, shape index: {}]
  %s2 = inlined_call_operand.hbm [shape: f32[128,128], index: 2, kind: input, shape index: {}]
  %s3 = inlined_call_operand.vmem [shape: f32[1,128], index: 3, kind: input, shape index: {}]
  %s4 = inlined_call_operand.vmem [shape: f32[1,128], index: 4, kind: input, shape index: {}]
  %s5 = inlined_call_operand.hbm [shape: f32[128,128], index: 5, kind: input, shape index: {}]
  %s6 = inlined_call_operand.hbm [shape: f32[1,1], index: 6, kind: output, shape index: {}]
  %s7 = sld [smem:[#allocation0]]
  $region89: #{tpu_custom_call.1} parent=0
    _
  %s9 = ssub.s32 1, %s7
  %s10 = scalar_select 0, %s9, %s7
  $region1: #{tpu_custom_call.1} parent=0
    #allocation6 [shape = 'u8[8192]{0}', space=vmem, size = 0x2000, scoped, tag = 'input window, operand 0']
    #allocation7 [shape = 's32[2]{0}', space=sflag, size = 0x8, scoped, tag = 'scoped memory for tpu_custom_call.1']
    #allocation8 [shape = 's32[2]{0}', space=sflag, size = 0x8, scoped, tag = 'scoped memory for tpu_custom_call.1']
    #allocation9 [shape = 'u8[8192]{0}', space=vmem, size = 0x2000, scoped, tag = 'input window, operand 1']
    #allocation10 [shape = 's32[2]{0}', space=sflag, size = 0x8, scoped, tag = 'scoped memory for tpu_custom_call.1']
    #allocation11 [shape = 'u8[65536]{0}', space=vmem, size = 0x10000, scoped, tag = 'input window, operand 2, single buffered']
    #allocation12 [shape = 'u8[65536]{0}', space=vmem, size = 0x10000, scoped, tag = 'input window, operand 5, single buffered']
    #allocation13 [shape = 's32[1]{0}', space=sflag, size = 0x4, scoped, tag = 'scoped memory for tpu_custom_call.1']
    #allocation14 [shape = 'u8[512]{0}', space=smem, size = 0x200, scoped, tag = 'output window, operand 0, single buffered']
    %11 = vsyncpa [#allocation7], 0
    %s12 = scalar_lea.sflag [#allocation7], 1
    %13 = vsyncpa %s12, 0
    %14 = vsyncpa [#allocation10], 0
    %s15 = scalar_lea.sflag [#allocation10], 1
    %16 = vsyncpa %s15, 0
    %17 = vsyncpa [#allocation13], 0
    %18 = vsyncpa [#allocation8], 0
    loop: start=0, step=1, limit=4
    $region2: #{tpu_custom_call.1} parent=1 // loop_pre_header
      _
    $region3: #{tpu_custom_call.1} parent=1 // loop_header
      %s20 = sphi 0, %s24
      %p21 = scmp.ge.s32.totalorder %s20, 4
      %s27 = sphi 0, %s39
      %s28 = sphi 0, %s35
      %s29 = sphi 0, %s27
      %s30 = sphi 0, %s28
      %s31 = sphi 0, %s29
      %s32 = sphi 0, %s30
      %s46 = sphi 0, %s48
      %s49 = sphi 0, %s46
      %s50 = sphi 0, %s49
      %s66 = sphi 0, %s50
      %s74 = sphi 0, %s76
      %s77 = sphi 0, %s74
      %s78 = sphi 0, %s77
      %s94 = sphi 0, %s78
      %s98 = sphi 0, %s98
      %s100 = sphi 0, %s98
      %s101 = sphi 0, %s100
      %s115 = sphi 0, %s101
      %s119 = sphi 0, %s119
      %s121 = sphi 0, %s119
      %s122 = sphi 0, %s121
      %s136 = sphi 0, %s122
      %s140 = sphi 0, %s140
      %s142 = sphi 0, %s140
      %s143 = sphi 0, %s142
      %s157 = sphi 0, %s143
      %s161 = sphi 0, %s161
      %s163 = sphi 0, %s161
      %s164 = sphi 0, %s163
      %s178 = sphi 0, %s164
      %s182 = sphi 0, %s182
      %s184 = sphi 0, %s182
      %s185 = sphi 0, %s184
      %s199 = sphi 0, %s185
    $region4: #{tpu_custom_call.1} parent=1 // loop_header_branch
      %23 = sbr.rel (%p21) target = $region8
    $region5: #{tpu_custom_call.1} parent=1 // loop_body
      %s25 = ssub.s32 %s20, 1
      %s26 = ssub.s32 %s20, 2
      %s33 = sadd.s32 1, %s28
      %p34 = scmp.ge.s32.totalorder %s33, 1
      %s35 = scalar_select %p34, 0, %s33
      %s36 = sadd.s32 1, %s27
      %s37 = scalar_select %p34, %s36, %s27
      %p38 = scmp.ge.s32.totalorder %s37, 2
      %s39 = scalar_select %p38, 0, %s37
      %s40 = ssub.s32 1, %s27
      %s41 = smul.u32 %s40, %s28
      %s42 = ssub.s32 1, %s39
      %s43 = smul.u32 %s42, %s35
      %s44 = ssub.s32 %s41, %s43
      %p45 = scmp.eq.s32.totalorder %s44, 0
      %s47 = sadd.s32 %s46, 1
      %s48 = scalar_select %p45, %s46, %s47
      %p51 = pneg %p45
      %p52 = scmp.eq.s32.totalorder %s20, 1
      %p53 = por %p51, %p52
      %p54 = scmp.ne.s32.totalorder %s46, %s49
      %p55 = scmp.eq.s32.totalorder %s20, 0
      %p56 = por %p54, %p55
      %p57 = scmp.ne.s32.totalorder %s46, %s49
      %p58 = scmp.eq.s32.totalorder %s25, 1
      %p59 = por %p57, %p58
      %p60 = scmp.ne.s32.totalorder %s49, %s50
      %p61 = scmp.eq.s32.totalorder %s25, 0
      %p62 = por %p60, %p61
      %p63 = scmp.ne.s32.totalorder %s49, %s50
      %p64 = scmp.eq.s32.totalorder %s26, 1
      %p65 = por %p63, %p64
      %p67 = scmp.ne.s32.totalorder %s50, %s66
      %p68 = scmp.eq.s32.totalorder %s26, 0
      %p69 = por %p67, %p68
      %s70 = smul.u32 %s27, %s28
      %s71 = smul.u32 %s39, %s35
      %s72 = ssub.s32 %s70, %s71
      %p73 = scmp.eq.s32.totalorder %s72, 0
      %s75 = sadd.s32 %s74, 1
      %s76 = scalar_select %p73, %s74, %s75
      %p79 = pneg %p73
      %p80 = scmp.eq.s32.totalorder %s20, 1
      %p81 = por %p79, %p80
      %p82 = scmp.ne.s32.totalorder %s74, %s77
      %p83 = scmp.eq.s32.totalorder %s20, 0
      %p84 = por %p82, %p83
      %p85 = scmp.ne.s32.totalorder %s74, %s77
      %p86 = scmp.eq.s32.totalorder %s25, 1
      %p87 = por %p85, %p86
      %p88 = scmp.ne.s32.totalorder %s77, %s78
      %p89 = scmp.eq.s32.totalorder %s25, 0
      %p90 = por %p88, %p89
      %p91 = scmp.ne.s32.totalorder %s77, %s78
      %p92 = scmp.eq.s32.totalorder %s26, 1
      %p93 = por %p91, %p92
      %p95 = scmp.ne.s32.totalorder %s78, %s94
      %p96 = scmp.eq.s32.totalorder %s26, 0
      %p97 = por %p95, %p96
      %s99 = sadd.s32 %s98, 1
      %p102 = scmp.eq.s32.totalorder %s20, 1
      %p103 = scmp.ne.s32.totalorder %s98, %s100
      %p104 = scmp.eq.s32.totalorder %s20, 0
      %p105 = por %p103, %p104
      %p106 = scmp.ne.s32.totalorder %s98, %s100
      %p107 = scmp.eq.s32.totalorder %s25, 1
      %p108 = por %p106, %p107
      %p109 = scmp.ne.s32.totalorder %s100, %s101
      %p110 = scmp.eq.s32.totalorder %s25, 0
      %p111 = por %p109, %p110
      %p112 = scmp.ne.s32.totalorder %s100, %s101
      %p113 = scmp.eq.s32.totalorder %s26, 1
      %p114 = por %p112, %p113
      %p116 = scmp.ne.s32.totalorder %s101, %s115
      %p117 = scmp.eq.s32.totalorder %s26, 0
      %p118 = por %p116, %p117
      %s120 = sadd.s32 %s119, 1
      %p123 = scmp.eq.s32.totalorder %s20, 1
      %p124 = scmp.ne.s32.totalorder %s119, %s121
      %p125 = scmp.eq.s32.totalorder %s20, 0
      %p126 = por %p124, %p125
      %p127 = scmp.ne.s32.totalorder %s119, %s121
      %p128 = scmp.eq.s32.totalorder %s25, 1
      %p129 = por %p127, %p128
      %p130 = scmp.ne.s32.totalorder %s121, %s122
      %p131 = scmp.eq.s32.totalorder %s25, 0
      %p132 = por %p130, %p131
      %p133 = scmp.ne.s32.totalorder %s121, %s122
      %p134 = scmp.eq.s32.totalorder %s26, 1
      %p135 = por %p133, %p134
      %p137 = scmp.ne.s32.totalorder %s122, %s136
      %p138 = scmp.eq.s32.totalorder %s26, 0
      %p139 = por %p137, %p138
      %s141 = sadd.s32 %s140, 1
      %p144 = scmp.eq.s32.totalorder %s20, 1
      %p145 = scmp.ne.s32.totalorder %s140, %s142
      %p146 = scmp.eq.s32.totalorder %s20, 0
      %p147 = por %p145, %p146
      %p148 = scmp.ne.s32.totalorder %s140, %s142
      %p149 = scmp.eq.s32.totalorder %s25, 1
      %p150 = por %p148, %p149
      %p151 = scmp.ne.s32.totalorder %s142, %s143
      %p152 = scmp.eq.s32.totalorder %s25, 0
      %p153 = por %p151, %p152
      %p154 = scmp.ne.s32.totalorder %s142, %s143
      %p155 = scmp.eq.s32.totalorder %s26, 1
      %p156 = por %p154, %p155
      %p158 = scmp.ne.s32.totalorder %s143, %s157
      %p159 = scmp.eq.s32.totalorder %s26, 0
      %p160 = por %p158, %p159
      %s162 = sadd.s32 %s161, 1
      %p165 = scmp.eq.s32.totalorder %s20, 1
      %p166 = scmp.ne.s32.totalorder %s161, %s163
      %p167 = scmp.eq.s32.totalorder %s20, 0
      %p168 = por %p166, %p167
      %p169 = scmp.ne.s32.totalorder %s161, %s163
      %p170 = scmp.eq.s32.totalorder %s25, 1
      %p171 = por %p169, %p170
      %p172 = scmp.ne.s32.totalorder %s163, %s164
      %p173 = scmp.eq.s32.totalorder %s25, 0
      %p174 = por %p172, %p173
      %p175 = scmp.ne.s32.totalorder %s163, %s164
      %p176 = scmp.eq.s32.totalorder %s26, 1
      %p177 = por %p175, %p176
      %p179 = scmp.ne.s32.totalorder %s164, %s178
      %p180 = scmp.eq.s32.totalorder %s26, 0
      %p181 = por %p179, %p180
      %s183 = sadd.s32 %s182, 1
      %p186 = scmp.eq.s32.totalorder %s20, 1
      %p187 = scmp.ne.s32.totalorder %s182, %s184
      %p188 = scmp.eq.s32.totalorder %s20, 0
      %p189 = por %p187, %p188
      %p190 = scmp.ne.s32.totalorder %s182, %s184
      %p191 = scmp.eq.s32.totalorder %s25, 1
      %p192 = por %p190, %p191
      %p193 = scmp.ne.s32.totalorder %s184, %s185
      %p194 = scmp.eq.s32.totalorder %s25, 0
      %p195 = por %p193, %p194
      %p196 = scmp.ne.s32.totalorder %s184, %s185
      %p197 = scmp.eq.s32.totalorder %s26, 1
      %p198 = por %p196, %p197
      %p200 = scmp.ne.s32.totalorder %s185, %s199
      %p201 = scmp.eq.s32.totalorder %s26, 0
      %p202 = por %p200, %p201
      %p203 = scmp.le.s32.totalorder 1, %s20
      %p204 = scmp.lt.s32.totalorder %s20, 3
      %p205 = pnand %p203, %p204
      %p206 = pneg %p205
      // Predicated region
      $region9: #{tpu_custom_call.1} parent=5 // pred_check
        _
      $region10: #{tpu_custom_call.1} parent=5 // pred_check_branch
        %208 = sbr.rel (%p205) target = $region12
      $region11: #{tpu_custom_call.1} parent=5 // pred_region
        %s209 = ssub.s32 %s20, 1
        // Predicated region
        $region13: #{tpu_custom_call.1} parent=11 // pred_check
          %p210 = pneg %p111
        $region14: #{tpu_custom_call.1} parent=11 // pred_check_branch
          %212 = sbr.rel (%p210) target = $region16
        $region15: #{tpu_custom_call.1} parent=11 // pred_region
          %s214 = ssub.s32 2048, 2048
          %215 = vsyncadd [#allocation10], %s214
          %s216 = sshll.u32 [#allocation11], 4
          %s217 = int_to_ptr.vmem [resolvable:$true] %s216
          %222 = dma.hbm_to_vmem [thread:$0]  %s2, 2048, %s217, [#allocation10], 128, 128, 8
        $region16: #{tpu_custom_call.1} parent=11 // pred_fallthru
          _
        // Predicated region
        $region17: #{tpu_custom_call.1} parent=11 // pred_check
          %p223 = pneg %p132
        $region18: #{tpu_custom_call.1} parent=11 // pred_check_branch
          %225 = sbr.rel (%p223) target = $region20
        $region19: #{tpu_custom_call.1} parent=11 // pred_region
          _
        $region20: #{tpu_custom_call.1} parent=11 // pred_fallthru
          _
        // Predicated region
        $region21: #{tpu_custom_call.1} parent=11 // pred_check
          %p226 = pneg %p153
        $region22: #{tpu_custom_call.1} parent=11 // pred_check_branch
          %228 = sbr.rel (%p226) target = $region24
        $region23: #{tpu_custom_call.1} parent=11 // pred_region
          _
        $region24: #{tpu_custom_call.1} parent=11 // pred_fallthru
          _
        // Predicated region
        $region25: #{tpu_custom_call.1} parent=11 // pred_check
          %p229 = pneg %p174
        $region26: #{tpu_custom_call.1} parent=11 // pred_check_branch
          %231 = sbr.rel (%p229) target = $region28
        $region27: #{tpu_custom_call.1} parent=11 // pred_region
          %s233 = ssub.s32 2048, 2048
          %234 = vsyncadd [#allocation13], %s233
          %s235 = sshll.u32 [#allocation12], 4
          %s236 = int_to_ptr.vmem [resolvable:$true] %s235
          %241 = dma.hbm_to_vmem [thread:$0]  %s5, 2048, %s236, [#allocation13], 128, 128, 8
        $region28: #{tpu_custom_call.1} parent=11 // pred_fallthru
          _
      $region12: #{tpu_custom_call.1} parent=5 // pred_fallthru
        _
      %p242 = scmp.lt.s32.totalorder %s20, 2
      // Predicated region
      $region29: #{tpu_custom_call.1} parent=5 // pred_check
        %p243 = pneg %p242
      $region30: #{tpu_custom_call.1} parent=5 // pred_check_branch
        %245 = sbr.rel (%p243) target = $region32
      $region31: #{tpu_custom_call.1} parent=5 // pred_region
        // Predicated region
        $region33: #{tpu_custom_call.1} parent=31 // pred_check
          %p246 = pneg %p56
        $region34: #{tpu_custom_call.1} parent=31 // pred_check_branch
          %248 = sbr.rel (%p246) target = $region36
        $region35: #{tpu_custom_call.1} parent=31 // pred_region
          %s249 = sand.u32 %s46, 1
          %s250 = scalar_lea.sflag [#allocation7], %s249
          %s251 = sand.u32 %s46, 1
          %s252 = smul.addr %s251, 8
          %s253 = scalar_lea.vmem [#allocation6], %s252
          %s254 = ssub.s32 1, %s27
          %s255 = smul.u32 %s254, %s28
          %s257 = ssub.s32 128, 128
          %258 = vsyncadd %s250, %s257
          %s259 = smul.addr %s255, 128
          %s260 = scalar_lea.hbm %s0, %s259
          %s262 = sshll.u32 %s253, 4
          %s263 = int_to_ptr.vmem [resolvable:$true] %s262
          %265 = dma.hbm_to_vmem [thread:$0]  %s260, 128, %s263, %s250
        $region36: #{tpu_custom_call.1} parent=31 // pred_fallthru
          _
        // Predicated region
        $region37: #{tpu_custom_call.1} parent=31 // pred_check
          %p266 = pneg %p84
        $region38: #{tpu_custom_call.1} parent=31 // pred_check_branch
          %268 = sbr.rel (%p266) target = $region40
        $region39: #{tpu_custom_call.1} parent=31 // pred_region
          %s269 = sand.u32 %s20, 1
          %s270 = scalar_lea.sflag [#allocation10], %s269
          %s271 = sand.u32 %s74, 1
          %s272 = smul.addr %s271, 8
          %s273 = scalar_lea.vmem [#allocation9], %s272
          %s274 = smul.u32 %s27, %s28
          %s276 = ssub.s32 128, 128
          %277 = vsyncadd %s270, %s276
          %s278 = smul.addr %s274, 128
          %s279 = scalar_lea.hbm %s1, %s278
          %s281 = sshll.u32 %s273, 4
          %s282 = int_to_ptr.vmem [resolvable:$true] %s281
          %284 = dma.hbm_to_vmem [thread:$0]  %s279, 128, %s282, %s270
        $region40: #{tpu_custom_call.1} parent=31 // pred_fallthru
          _
      $region32: #{tpu_custom_call.1} parent=5 // pred_fallthru
        _
      %p285 = scmp.le.s32.totalorder 1, %s20
      %p286 = scmp.lt.s32.totalorder %s20, 3
      %p287 = pnand %p285, %p286
      %p288 = pneg %p287
      // Predicated region
      $region41: #{tpu_custom_call.1} parent=5 // pred_check
        _
      $region42: #{tpu_custom_call.1} parent=5 // pred_check_branch
        %290 = sbr.rel (%p287) target = $region44
      $region43: #{tpu_custom_call.1} parent=5 // pred_region
        %s291 = ssub.s32 %s20, 1
        %s292 = sand.u32 %s49, 1
        %s293 = scalar_lea.sflag [#allocation7], %s292
        %s294 = sand.u32 %s49, 1
        %s295 = smul.addr %s294, 8
        %s296 = scalar_lea.vmem [#allocation6], %s295
        // Predicated region
        $region45: #{tpu_custom_call.1} parent=43 // pred_check
          %p297 = pneg %p62
        $region46: #{tpu_custom_call.1} parent=43 // pred_check_branch
          %299 = sbr.rel (%p297) target = $region48
        $region47: #{tpu_custom_call.1} parent=43 // pred_region
          %300 = dma.done %s293, 128
        $region48: #{tpu_custom_call.1} parent=43 // pred_fallthru
          _
        %s301 = sand.u32 %s25, 1
        %s302 = scalar_lea.sflag [#allocation10], %s301
        %s303 = sand.u32 %s77, 1
        %s304 = smul.addr %s303, 8
        %s305 = scalar_lea.vmem [#allocation9], %s304
        // Predicated region
        $region49: #{tpu_custom_call.1} parent=43 // pred_check
          %p306 = pneg %p90
        $region50: #{tpu_custom_call.1} parent=43 // pred_check_branch
          %308 = sbr.rel (%p306) target = $region52
        $region51: #{tpu_custom_call.1} parent=43 // pred_region
          %309 = dma.done %s302, 128
        $region52: #{tpu_custom_call.1} parent=43 // pred_fallthru
          _
        // Predicated region
        $region53: #{tpu_custom_call.1} parent=43 // pred_check
          %p310 = pneg %p111
        $region54: #{tpu_custom_call.1} parent=43 // pred_check_branch
          %312 = sbr.rel (%p310) target = $region56
        $region55: #{tpu_custom_call.1} parent=43 // pred_region
          %313 = dma.done [#allocation10], 2048
        $region56: #{tpu_custom_call.1} parent=43 // pred_fallthru
          _
        // Predicated region
        $region57: #{tpu_custom_call.1} parent=43 // pred_check
          %p314 = pneg %p174
        $region58: #{tpu_custom_call.1} parent=43 // pred_check_branch
          %316 = sbr.rel (%p314) target = $region60
        $region59: #{tpu_custom_call.1} parent=43 // pred_region
          %317 = dma.done [#allocation13], 2048
        $region60: #{tpu_custom_call.1} parent=43 // pred_fallthru
          _
        %s318 = sand.u32 %s49, 1
        %s319 = scalar_lea.sflag [#allocation7], %s318
        %s320 = sand.u32 %s49, 1
        %s321 = smul.addr %s320, 8
        %s322 = scalar_lea.vmem [#allocation6], %s321
        %p323 = pneg %p62
        %p324 = pneg %p59
        %s325 = sand.u32 %s25, 1
        %s326 = scalar_lea.sflag [#allocation10], %s325
        %s327 = sand.u32 %s77, 1
        %s328 = smul.addr %s327, 8
        %s329 = scalar_lea.vmem [#allocation9], %s328
        %p330 = pneg %p90
        %p331 = pneg %p87
        %p332 = pneg %p111
        %p333 = pneg %p108
        %p334 = pneg %p132
        %p335 = pneg %p129
        %p336 = pneg %p153
        %p337 = pneg %p150
        %p338 = pneg %p174
        %p339 = pneg %p171
        %p340 = pneg %p195
        %p341 = pneg %p192
        %s342 = ssub.s32 1, %s29
        %s343 = smul.u32 %s342, %s30
        %s344 = smul.u32 %s29, %s30
        %p345 = scmp.eq.s32.totalorder %s29, 0
        // Predicated region
        $region61: #{tpu_custom_call.1} parent=43 // pred_check
          %p346 = pneg %p345
        $region62: #{tpu_custom_call.1} parent=43 // pred_check_branch
          %348 = sbr.rel (%p346) target = $region64
        $region63: #{tpu_custom_call.1} parent=43 // pred_region
          %p349 = scmp.eq.s32.totalorder %s30, 0
          // Predicated region
          $region65: #{tpu_custom_call.1} parent=63 // pred_check
            %p350 = pneg %p349
          $region66: #{tpu_custom_call.1} parent=63 // pred_check_branch
            %352 = sbr.rel (%p350) target = $region68
          $region67: #{tpu_custom_call.1} parent=63 // pred_region
            %353 = vst [vmem:[#allocation3] sm:$0x1] 0.0
            %354 = vst [vmem:[#allocation4] sm:$0x1] 0.0
            %s355 = scalar_lea.smem [#allocation5], 0
            %356 = sst [smem:[%s355]] 0.0
          $region68: #{tpu_custom_call.1} parent=63 // pred_fallthru
            _
          %v357 = vld [vmem:[%s296] sm:$0xff]
          %v358 = vld [vmem:[#allocation11] sm:$0xff]
          %v359 = vld [vmem:[#allocation11 + $0x8] sm:$0xff]
          %v360 = vld [vmem:[#allocation11 + $0x10] sm:$0xff]
          %v361 = vld [vmem:[#allocation11 + $0x18] sm:$0xff]
          %v362 = vld [vmem:[#allocation11 + $0x20] sm:$0xff]
          %v363 = vld [vmem:[#allocation11 + $0x28] sm:$0xff]
          %v364 = vld [vmem:[#allocation11 + $0x30] sm:$0xff]
          %v365 = vld [vmem:[#allocation11 + $0x38] sm:$0xff]
          %v366 = vld [vmem:[#allocation11 + $0x40] sm:$0xff]
          %v367 = vld [vmem:[#allocation11 + $0x48] sm:$0xff]
          %v368 = vld [vmem:[#allocation11 + $0x50] sm:$0xff]
          %v369 = vld [vmem:[#allocation11 + $0x58] sm:$0xff]
          %v370 = vld [vmem:[#allocation11 + $0x60] sm:$0xff]
          %v371 = vld [vmem:[#allocation11 + $0x68] sm:$0xff]
          %v372 = vld [vmem:[#allocation11 + $0x70] sm:$0xff]
          %v373 = vld [vmem:[#allocation11 + $0x78] sm:$0xff]
          %374 = vmatprep.subr.mxu0 0.0
          %375 = vmatpush1.msra.mxu0 %v373
          %376 = vmatprep.subr.mxu0 0.0
          %377 = vmatpush1.msra.mxu0 %v372
          %378 = vmatprep.subr.mxu0 0.0
          %379 = vmatpush1.msra.mxu0 %v371
          %380 = vmatprep.subr.mxu0 0.0
          %381 = vmatpush1.msra.mxu0 %v370
          %382 = vmatprep.subr.mxu0 0.0
          %383 = vmatpush1.msra.mxu0 %v369
          %384 = vmatprep.subr.mxu0 0.0
          %385 = vmatpush1.msra.mxu0 %v368
          %386 = vmatprep.subr.mxu0 0.0
          %387 = vmatpush1.msra.mxu0 %v367
          %388 = vmatprep.subr.mxu0 0.0
          %389 = vmatpush1.msra.mxu0 %v366
          %390 = vmatprep.subr.mxu0 0.0
          %391 = vmatpush1.msra.mxu0 %v365
          %392 = vmatprep.subr.mxu0 0.0
          %393 = vmatpush1.msra.mxu0 %v364
          %394 = vmatprep.subr.mxu0 0.0
          %395 = vmatpush1.msra.mxu0 %v363
          %396 = vmatprep.subr.mxu0 0.0
          %397 = vmatpush1.msra.mxu0 %v362
          %398 = vmatprep.subr.mxu0 0.0
          %399 = vmatpush1.msra.mxu0 %v361
          %400 = vmatprep.subr.mxu0 0.0
          %401 = vmatpush1.msra.mxu0 %v360
          %402 = vmatprep.subr.mxu0 0.0
          %403 = vmatpush1.msra.mxu0 %v359
          %404 = vmatprep.subr.mxu0 0.0
          %405 = vmatpush1.msra.mxu0 %v358
          %406 = vmatprep.subr.mxu0 0.0
          %407 = vmatpush2.msra.mxu0 0.0
          %408 = vmatprep.subr.mxu0 0.0
          %409 = vmatpush2.msra.mxu0 0.0
          %410 = vmatprep.subr.mxu0 0.0
          %411 = vmatpush2.msra.mxu0 0.0
          %412 = vmatprep.subr.mxu0 0.0
          %413 = vmatpush2.msra.mxu0 0.0
          %414 = vmatprep.subr.mxu0 0.0
          %415 = vmatpush2.msra.mxu0 0.0
          %416 = vmatprep.subr.mxu0 0.0
          %417 = vmatpush2.msra.mxu0 0.0
          %418 = vmatprep.subr.mxu0 0.0
          %419 = vmatpush2.msra.mxu0 0.0
          %420 = vmatprep.subr.mxu0 0.0
          %421 = vmatpush2.msra.mxu0 0.0
          %422 = vmatprep.subr.mxu0 0.0
          %423 = vmatpush2.msra.mxu0 0.0
          %424 = vmatprep.subr.mxu0 0.0
          %425 = vmatpush2.msra.mxu0 0.0
          %426 = vmatprep.subr.mxu0 0.0
          %427 = vmatpush2.msra.mxu0 0.0
          %428 = vmatprep.subr.mxu0 0.0
          %429 = vmatpush2.msra.mxu0 0.0
          %430 = vmatprep.subr.mxu0 0.0
          %431 = vmatpush2.msra.mxu0 0.0
          %432 = vmatprep.subr.mxu0 0.0
          %433 = vmatpush2.msra.mxu0 0.0
          %434 = vmatprep.subr.mxu0 0.0
          %435 = vmatpush2.msra.mxu0 0.0
          %436 = vmatprep.subr.mxu0 0.0
          %437 = vmatpush2.msra.mxu0 0.0
          %438 = vmatprep.mubr.f32.mxu0 0.0
          %439 = vmatmul.mubr.f32.gmra.mxu0 %v357
          %v440 = vpop.f32.mrf.mxu0
          %v441 = vadd.f32 0.0, %v440
          %v442 = vpop.f32.mrf.mxu0
          %443 = vdwg.mxu0
          %v444 = vld [vmem:[#allocation3] sm:$0x1]
          %v445 = vrot.slane %v441, 4
          %v446 = vadd.f32 %v441, %v445
          %v447 = vrot.slane %v446, 2
          %v448 = vadd.f32 %v446, %v447
          %v449 = vrot.slane %v448, 1
          %v450 = vadd.f32 %v448, %v449
          %v451 = vadd.f32 %v444, %v450
          %452 = vst [vmem:[#allocation3] sm:$0x1] %v451
          %v453 = vld [vmem:[#allocation4] sm:$0x1]
          %v454 = vmul.f32 %v441, %v441
          %v455 = vrot.slane %v454, 4
          %v456 = vadd.f32 %v454, %v455
          %v457 = vrot.slane %v456, 2
          %v458 = vadd.f32 %v456, %v457
          %v459 = vrot.slane %v458, 1
          %v460 = vadd.f32 %v458, %v459
          %v461 = vadd.f32 %v453, %v460
          %462 = vst [vmem:[#allocation4] sm:$0x1] %v461
          %s463 = smul.u32 %s30, 8
          %s464 = scalar_lea.vmem [#allocation2], %s463
          %465 = vst [vmem:[%s464] sm:$0xff] %v441
        $region64: #{tpu_custom_call.1} parent=43 // pred_fallthru
          _
        %p466 = scmp.eq.s32.totalorder %s29, 1
        // Predicated region
        $region69: #{tpu_custom_call.1} parent=43 // pred_check
          %p467 = pneg %p466
        $region70: #{tpu_custom_call.1} parent=43 // pred_check_branch
          %469 = sbr.rel (%p467) target = $region72
        $region71: #{tpu_custom_call.1} parent=43 // pred_region
          %s470 = smul.u32 %s30, 8
          %s471 = scalar_lea.vmem [#allocation2], %s470
          %v472 = vld [vmem:[%s471] sm:$0xff]
          %v473 = vld [vmem:[#allocation3] sm:$0x1]
          %v474 = vmul.f32 %v473, 0.125
          %v475 = vld [vmem:[#allocation4] sm:$0x1]
          %v476 = vmul.f32 %v475, 0.125
          %v477 = vmul.f32 %v474, %v474
          %v478 = vsub.f32 %v476, %v477
          %v479 = vmax.f32 %v478, 0.0
          %v480 = vadd.f32 %v479, 1e-05
          %v481 = vrsqrt.pop %v480
          %v482 = vld [vmem:[%s3] sm:$0x1]
          %v483 = vmul.f32 %v482, %v481
          %v484 = vld [vmem:[%s4] sm:$0x1]
          %v485 = vmul.f32 %v474, %v483
          %v486 = vsub.f32 %v484, %v485
          %v488 = vlaneseq
          %v489 = vshrl.u32 %v488, 7
          %v490 = vsub.s32 0, %v489
          %v491 = vrot.slane %v483, %v490
          %v493 = vmul.f32 %v472, %v491
          %v495 = vlaneseq
          %v496 = vshrl.u32 %v495, 7
          %v497 = vsub.s32 0, %v496
          %v498 = vrot.slane %v486, %v497
          %v500 = vadd.f32 %v493, %v498
          %v501 = vmax.f32 %v500, 0.0
          %v502 = vld [vmem:[#allocation12] sm:$0xff]
          %v503 = vld [vmem:[#allocation12 + $0x8] sm:$0xff]
          %v504 = vld [vmem:[#allocation12 + $0x10] sm:$0xff]
          %v505 = vld [vmem:[#allocation12 + $0x18] sm:$0xff]
          %v506 = vld [vmem:[#allocation12 + $0x20] sm:$0xff]
          %v507 = vld [vmem:[#allocation12 + $0x28] sm:$0xff]
          %v508 = vld [vmem:[#allocation12 + $0x30] sm:$0xff]
          %v509 = vld [vmem:[#allocation12 + $0x38] sm:$0xff]
          %v510 = vld [vmem:[#allocation12 + $0x40] sm:$0xff]
          %v511 = vld [vmem:[#allocation12 + $0x48] sm:$0xff]
          %v512 = vld [vmem:[#allocation12 + $0x50] sm:$0xff]
          %v513 = vld [vmem:[#allocation12 + $0x58] sm:$0xff]
          %v514 = vld [vmem:[#allocation12 + $0x60] sm:$0xff]
          %v515 = vld [vmem:[#allocation12 + $0x68] sm:$0xff]
          %v516 = vld [vmem:[#allocation12 + $0x70] sm:$0xff]
          %v517 = vld [vmem:[#allocation12 + $0x78] sm:$0xff]
          %518 = vmatprep.subr.mxu0 0.0
          %519 = vmatpush1.msra.mxu0 %v517
          %520 = vmatprep.subr.mxu0 0.0
          %521 = vmatpush1.msra.mxu0 %v516
          %522 = vmatprep.subr.mxu0 0.0
          %523 = vmatpush1.msra.mxu0 %v515
          %524 = vmatprep.subr.mxu0 0.0
          %525 = vmatpush1.msra.mxu0 %v514
          %526 = vmatprep.subr.mxu0 0.0
          %527 = vmatpush1.msra.mxu0 %v513
          %528 = vmatprep.subr.mxu0 0.0
          %529 = vmatpush1.msra.mxu0 %v512
          %530 = vmatprep.subr.mxu0 0.0
          %531 = vmatpush1.msra.mxu0 %v511
          %532 = vmatprep.subr.mxu0 0.0
          %533 = vmatpush1.msra.mxu0 %v510
          %534 = vmatprep.subr.mxu0 0.0
          %535 = vmatpush1.msra.mxu0 %v509
          %536 = vmatprep.subr.mxu0 0.0
          %537 = vmatpush1.msra.mxu0 %v508
          %538 = vmatprep.subr.mxu0 0.0
          %539 = vmatpush1.msra.mxu0 %v507
          %540 = vmatprep.subr.mxu0 0.0
          %541 = vmatpush1.msra.mxu0 %v506
          %542 = vmatprep.subr.mxu0 0.0
          %543 = vmatpush1.msra.mxu0 %v505
          %544 = vmatprep.subr.mxu0 0.0
          %545 = vmatpush1.msra.mxu0 %v504
          %546 = vmatprep.subr.mxu0 0.0
          %547 = vmatpush1.msra.mxu0 %v503
          %548 = vmatprep.subr.mxu0 0.0
          %549 = vmatpush1.msra.mxu0 %v502
          %550 = vmatprep.subr.mxu0 0.0
          %551 = vmatpush2.msra.mxu0 0.0
          %552 = vmatprep.subr.mxu0 0.0
          %553 = vmatpush2.msra.mxu0 0.0
          %554 = vmatprep.subr.mxu0 0.0
          %555 = vmatpush2.msra.mxu0 0.0
          %556 = vmatprep.subr.mxu0 0.0
          %557 = vmatpush2.msra.mxu0 0.0
          %558 = vmatprep.subr.mxu0 0.0
          %559 = vmatpush2.msra.mxu0 0.0
          %560 = vmatprep.subr.mxu0 0.0
          %561 = vmatpush2.msra.mxu0 0.0
          %562 = vmatprep.subr.mxu0 0.0
          %563 = vmatpush2.msra.mxu0 0.0
          %564 = vmatprep.subr.mxu0 0.0
          %565 = vmatpush2.msra.mxu0 0.0
          %566 = vmatprep.subr.mxu0 0.0
          %567 = vmatpush2.msra.mxu0 0.0
          %568 = vmatprep.subr.mxu0 0.0
          %569 = vmatpush2.msra.mxu0 0.0
          %570 = vmatprep.subr.mxu0 0.0
          %571 = vmatpush2.msra.mxu0 0.0
          %572 = vmatprep.subr.mxu0 0.0
          %573 = vmatpush2.msra.mxu0 0.0
          %574 = vmatprep.subr.mxu0 0.0
          %575 = vmatpush2.msra.mxu0 0.0
          %576 = vmatprep.subr.mxu0 0.0
          %577 = vmatpush2.msra.mxu0 0.0
          %578 = vmatprep.subr.mxu0 0.0
          %579 = vmatpush2.msra.mxu0 0.0
          %580 = vmatprep.subr.mxu0 0.0
          %581 = vmatpush2.msra.mxu0 0.0
          %582 = vmatprep.mubr.f32.mxu0 0.0
          %583 = vmatmul.mubr.f32.gmra.mxu0 %v501
          %v584 = vpop.f32.mrf.mxu0
          %v585 = vadd.f32 0.0, %v584
          %v586 = vpop.f32.mrf.mxu0
          %587 = vdwg.mxu0
          %v588 = vld [vmem:[%s305] sm:$0xff]
          %v589 = vmul.f32 %v585, %v585
          %590 = vadd.xlane.f32.xlu0 %v589
          %v591 = vpop.xlane.xlu0 %590
          %v592 = vmax.f32 %v591, 1e-24
          %v593 = vrsqrt.pop %v592
          %v594 = vmul.f32 %v588, %v588
          %595 = vadd.xlane.f32.xlu0 %v594
          %v596 = vpop.xlane.xlu0 %595
          %v597 = vmax.f32 %v596, 1e-24
          %v598 = vrsqrt.pop %v597
          %v599 = vmul.f32 %v585, %v588
          %600 = vadd.xlane.f32.xlu0 %v599
          %v601 = vpop.xlane.xlu0 %600
          %v602 = vmul.f32 %v601, %v593
          %v603 = vmul.f32 %v602, %v598
          %s604 = sld [smem:[#allocation5]]
          %vm605 = vcmask 7168
          %v606 = vsel %vm605, %v603, 0.0
          %607 = vadd.xlane.f32.xlu0 %v606
          %v608 = vpop.xlane.xlu0 %607
          %v609 = vrot.slane %v608, 4
          %v610 = vadd.f32 %v608, %v609
          %v611 = vrot.slane %v610, 2
          %v612 = vadd.f32 %v610, %v611
          %v613 = vrot.slane %v612, 1
          %v614 = vadd.f32 %v612, %v613
          %s615 = vtos %v614
          %s616 = smul.f32 %s615, -0.125
          %s617 = sadd.f32 %s604, %s616
          %s618 = scalar_lea.smem [#allocation5], 0
          %619 = sst [smem:[%s618]] %s617
          %p620 = scmp.eq.s32.totalorder %s30, 0
          // Predicated region
          $region73: #{tpu_custom_call.1} parent=71 // pred_check
            %p621 = pneg %p620
          $region74: #{tpu_custom_call.1} parent=71 // pred_check_branch
            %623 = sbr.rel (%p621) target = $region76
          $region75: #{tpu_custom_call.1} parent=71 // pred_region
            %s624 = sld [smem:[#allocation5]]
            %s625 = scalar_lea.smem [#allocation14], 0
            %626 = sst [smem:[%s625]] %s624
          $region76: #{tpu_custom_call.1} parent=71 // pred_fallthru
            _
        $region72: #{tpu_custom_call.1} parent=43 // pred_fallthru
          _
        // Predicated region
        $region77: #{tpu_custom_call.1} parent=43 // pred_check
          %p627 = pneg %p192
        $region78: #{tpu_custom_call.1} parent=43 // pred_check_branch
          %629 = sbr.rel (%p627) target = $region80
        $region79: #{tpu_custom_call.1} parent=43 // pred_region
          %s631 = ssub.s32 16, 16
          %632 = vsyncadd [#allocation8], %s631
          %635 = dma.smem_to_hbm [#allocation14], 16, %s6, [#allocation8]
        $region80: #{tpu_custom_call.1} parent=43 // pred_fallthru
          _
        // Predicated region
        $region81: #{tpu_custom_call.1} parent=43 // pred_check
          %p636 = pneg %p192
        $region82: #{tpu_custom_call.1} parent=43 // pred_check_branch
          %638 = sbr.rel (%p636) target = $region84
        $region83: #{tpu_custom_call.1} parent=43 // pred_region
          %639 = dma.done [#allocation8], 16
        $region84: #{tpu_custom_call.1} parent=43 // pred_fallthru
          _
        %640 = sfence
      $region44: #{tpu_custom_call.1} parent=5 // pred_fallthru
        _
      %p641 = scmp.le.s32.totalorder 2, %s20
      // Predicated region
      $region85: #{tpu_custom_call.1} parent=5 // pred_check
        %p642 = pneg %p641
      $region86: #{tpu_custom_call.1} parent=5 // pred_check_branch
        %644 = sbr.rel (%p642) target = $region88
      $region87: #{tpu_custom_call.1} parent=5 // pred_region
        %s645 = ssub.s32 %s20, 2
      $region88: #{tpu_custom_call.1} parent=5 // pred_fallthru
        _
    $region6: #{tpu_custom_call.1} parent=1 // loop_footer
      %s24 = sadd.s32 1, %s20
    $region7: #{tpu_custom_call.1} parent=1 // loop_footer_branch
      %19 = sbr.rel target = $region3
    $region8: #{tpu_custom_call.1} parent=1 // loop_exit
      _
    %646 = vsyncpa [#allocation7], 1
    %s647 = scalar_lea.sflag [#allocation7], 1
    %648 = vsyncpa %s647, 1
    %649 = vsyncpa [#allocation10], 1
    %s650 = scalar_lea.sflag [#allocation10], 1
    %651 = vsyncpa %s650, 1
    %652 = vsyncpa [#allocation13], 1
    %653 = vsyncpa [#allocation8], 1
    %s654 = scalar_lea.sflag [#allocation8], 1
    %655 = vsyncpa %s654, 1

</llo_original>
